<compile_context>
chip_gen: v5e
topology: v5e:2x2
jax: 0.10.0
libtpu: 0.0.40
codegen_flags: <defaults>
</compile_context>

<pallas_src>
import jax
import jax.numpy as jnp
from jax.experimental import pallas as pl
from jax.experimental.pallas import tpu as pltpu  # noqa: F401  (TPU backend; no extra params needed for a grid-less call)


# ----------------------------------------------------------------------------
# Single fused kernel: GIN stack (both graph sets stacked) + mean pool + head.
# All operands fit in VMEM; everything lands on the MXU as small matmuls.
# ----------------------------------------------------------------------------
def fused_model_kernel(x_ref, a_ref, pool1_ref, pool2_ref,
                       wg_ref, bg_ref,
                       w1a_ref, w1b_ref, b1_ref,
                       w2_ref, b2_ref, w3_ref, b3_ref,
                       o_ref):
    num_layers = wg_ref.shape[0]
    G, N, _ = a_ref.shape            # G = 2*B graphs (side 1 then side 2)
    D = x_ref.shape[1]

    a = a_ref[...]                   # (G, N, N)   adjacency with self loops
    h = x_ref[...]                   # (G*N, D)    node features, all graphs

    for l in range(num_layers):      # static unroll; num_layer is small
        # (A_hat @ H) @ W == A_hat @ (H @ W): shared-weight matmul once over
        # all G*N rows, then ONE batched per-graph aggregation (no block-diag).
        z = jnp.dot(h, wg_ref[l], preferred_element_type=jnp.float32)       # (G*N, D)
        agg = jnp.einsum('gij,gjd->gid', a, z.reshape(G, N, D),
                         preferred_element_type=jnp.float32)                 # (G, N, D)
        h = jnp.maximum(agg.reshape(G * N, D) + bg_ref[l], 0.0)

    # Mean pooling per graph as two small matmuls -> (B, D) per side.
    p1 = jnp.dot(pool1_ref[...], h, preferred_element_type=jnp.float32)      # h_global_1
    p2 = jnp.dot(pool2_ref[...], h, preferred_element_type=jnp.float32)      # h_global_2

    # fc1 over concat(p1, p2) folded into two half-matmuls (no lane concat).
    y = (jnp.dot(p1, w1a_ref[...], preferred_element_type=jnp.float32)
         + jnp.dot(p2, w1b_ref[...], preferred_element_type=jnp.float32)
         + b1_ref[...])
    y = jnp.maximum(y, 0.0)
    y = jnp.dot(y, w2_ref[...], preferred_element_type=jnp.float32) + b2_ref[...]
    y = jnp.maximum(y, 0.0)
    # fc3 with the (64, 1) weight zero-padded to (64, 128) -> lane-dense store.
    o_ref[...] = jnp.dot(y, w3_ref[...], preferred_element_type=jnp.float32) + b3_ref[...]


# ----------------------------------------------------------------------------
# Wrapper (cheap JAX glue, fused by XLA under jit).
# ----------------------------------------------------------------------------
def model001_forward(params, x1, a1, x2, a2):
    """x1,x2: [B, N, emb_dim] node features; a1,a2: [B, N, N] adjacency (with self loops)."""
    B, N, D = x1.shape

    # Stack both graph sides: one GIN pass over all 2B graphs.
    x = jnp.concatenate([x1, x2], axis=0).reshape(2 * B * N, D)   # (2B*N, D)
    a = jnp.concatenate([a1, a2], axis=0)                         # (2B, N, N)

    # Mean-pool matrices for each side: (B, 2B*N).
    pool = jnp.repeat(jnp.eye(2 * B, dtype=x1.dtype), N, axis=1) / N
    pool1, pool2 = pool[:B], pool[B:]

    w1 = params["w1"]
    w1a, w1b = w1[:D], w1[D:]                                     # fold the h_global concat
    w3p = jnp.pad(params["w3"], ((0, 0), (0, 127)))               # (64, 128) lane-dense
    b3p = jnp.pad(params["b3"], ((0, 0), (0, 127)))               # (1, 128)

    out_wide = pl.pallas_call(
        fused_model_kernel,
        out_shape=jax.ShapeDtypeStruct((B, 128), jnp.float32),
    )(x, a, pool1, pool2,
      params["gin_w"], params["gin_b"],
      w1a, w1b, params["b1"],
      params["w2"], params["b2"],
      w3p, b3p)

    return out_wide[:, :1]                                        # (B, 1)


# ----------------------------------------------------------------------------
# Parameter init (shapes mirror the PyTorch module).
# ----------------------------------------------------------------------------
def init_params(key, emb_dim, num_layer):
    ks = jax.random.split(key, 2 * num_layer + 6)
    gin_w, gin_b = [], []
    for l in range(num_layer):
        w = jax.random.normal(ks[2 * l], (emb_dim, emb_dim), jnp.float32) * (1.0 / jnp.sqrt(emb_dim))
        b = jax.random.normal(ks[2 * l + 1], (1, emb_dim), jnp.float32) * 0.01
        gin_w.append(w)
        gin_b.append(b)
    params = {
        "gin_w": jnp.stack(gin_w),          # (L, D, D)
        "gin_b": jnp.stack(gin_b),          # (L, 1, D)
    }
    i = 2 * num_layer
    # fc1: Linear(emb_dim*2, 128), fc2: Linear(128, 64), fc3: Linear(64, 1)
    params["w1"] = jax.random.normal(ks[i + 0], (emb_dim * 2, 128), jnp.float32) * (1.0 / jnp.sqrt(emb_dim * 2))
    params["b1"] = jax.random.normal(ks[i + 1], (1, 128), jnp.float32) * 0.01
    params["w2"] = jax.random.normal(ks[i + 2], (128, 64), jnp.float32) * (1.0 / jnp.sqrt(128))
    params["b2"] = jax.random.normal(ks[i + 3], (1, 64), jnp.float32) * 0.01
    params["w3"] = jax.random.normal(ks[i + 4], (64, 1), jnp.float32) * (1.0 / jnp.sqrt(64))
    params["b3"] = jax.random.normal(ks[i + 5], (1, 1), jnp.float32) * 0.01
    return params


# ----------------------------------------------------------------------------
# Pure-JAX reference (high precision) for a correctness sanity check.
# ----------------------------------------------------------------------------
def reference_forward(params, x1, a1, x2, a2):
    hp = jax.lax.Precision.HIGHEST

    def gin(x, a):
        h = x
        for l in range(params["gin_w"].shape[0]):
            z = jnp.einsum("bnd,de->bne", h, params["gin_w"][l], precision=hp)
            agg = jnp.einsum("bij,bjd->bid", a, z, precision=hp)
            h = jnp.maximum(agg + params["gin_b"][l][None], 0.0)
        return h.mean(axis=1)

    p1, p2 = gin(x1, a1), gin(x2, a2)
    hg = jnp.concatenate([p1, p2], axis=1)
    h = jnp.maximum(jnp.dot(hg, params["w1"], precision=hp) + params["b1"], 0.0)
    h = jnp.maximum(jnp.dot(h, params["w2"], precision=hp) + params["b2"], 0.0)
    return jnp.dot(h, params["w3"], precision=hp) + params["b3"]


if __name__ == "__main__":
    B, N, EMB_DIM, NUM_LAYER = 2, 16, 32, 3   # small shapes (emb_dim scaled down from 300)

    key = jax.random.PRNGKey(0)
    k_par, k_x1, k_x2, k_a1, k_a2 = jax.random.split(key, 5)
    params = init_params(k_par, EMB_DIM, NUM_LAYER)

    x1 = jax.random.normal(k_x1, (B, N, EMB_DIM), jnp.float32)
    x2 = jax.random.normal(k_x2, (B, N, EMB_DIM), jnp.float32)

    def make_adj(k):
        u = jax.random.uniform(k, (B, N, N))
        a = (u < 0.25).astype(jnp.float32)
        a = jnp.maximum(a, jnp.transpose(a, (0, 2, 1)))            # symmetric
        return a + jnp.eye(N, dtype=jnp.float32)[None, :, :]       # add self loops

    a1 = make_adj(k_a1)
    a2 = make_adj(k_a2)

    fwd = jax.jit(model001_forward)
    out = fwd(params, x1, a1, x2, a2)
    jax.block_until_ready(out)

    assert out.shape == (B, 1) and out.dtype == jnp.float32
    ref = reference_forward(params, x1, a1, x2, a2)
    assert bool(jnp.allclose(out, ref, rtol=5e-2, atol=5e-2))
    print("KERNEL_OK")
</pallas_src>

<mosaic_0001>
module attributes {stable_mosaic.version = 11 : i64} {
  func.func @fused_model_kernel(%arg0: memref<64x32xf32, #tpu.memory_space<vmem>>, %arg1: memref<4x16x16xf32, #tpu.memory_space<vmem>>, %arg2: memref<2x64xf32, #tpu.memory_space<vmem>>, %arg3: memref<2x64xf32, #tpu.memory_space<vmem>>, %arg4: memref<3x32x32xf32, #tpu.memory_space<vmem>>, %arg5: memref<3x1x32xf32, #tpu.memory_space<vmem>>, %arg6: memref<32x128xf32, #tpu.memory_space<vmem>>, %arg7: memref<32x128xf32, #tpu.memory_space<vmem>>, %arg8: memref<1x128xf32, #tpu.memory_space<vmem>>, %arg9: memref<128x64xf32, #tpu.memory_space<vmem>>, %arg10: memref<1x64xf32, #tpu.memory_space<vmem>>, %arg11: memref<64x128xf32, #tpu.memory_space<vmem>>, %arg12: memref<1x128xf32, #tpu.memory_space<vmem>>, %arg13: memref<2x128xf32, #tpu.memory_space<vmem>>) attributes {dimension_semantics = [], scalar_prefetch = 0 : i64, scratch_operands = 0 : i64, tpu.core_type = #tpu.core_type<tc>} {
    %c0 = arith.constant 0 : index
    %c0_0 = arith.constant 0 : index
    %c0_1 = arith.constant 0 : index
    %0 = vector.load %arg1[%c0, %c0_0, %c0_1] : memref<4x16x16xf32, #tpu.memory_space<vmem>>, vector<4x16x16xf32>
    %c0_2 = arith.constant 0 : index
    %c0_3 = arith.constant 0 : index
    %1 = vector.load %arg0[%c0_2, %c0_3] : memref<64x32xf32, #tpu.memory_space<vmem>>, vector<64x32xf32>
    %c0_4 = arith.constant 0 : index
    %c0_5 = arith.constant 0 : index
    %c0_6 = arith.constant 0 : index
    %2 = vector.load %arg4[%c0_4, %c0_5, %c0_6] : memref<3x32x32xf32, #tpu.memory_space<vmem>>, vector<1x32x32xf32>
    %3 = vector.shape_cast %2 : vector<1x32x32xf32> to vector<32x32xf32>
    %cst = arith.constant dense<0.000000e+00> : vector<64x32xf32>
    %4 = tpu.matmul %1, %3, %cst {dimension_numbers = #tpu.dot_dimension_numbers<[1], [0], [0], [1], [0, 0, 1, 1], [], []>} : vector<64x32xf32>, vector<32x32xf32>, vector<64x32xf32> -> vector<64x32xf32>
    %5 = vector.shape_cast %4 : vector<64x32xf32> to vector<4x16x32xf32>
    "tpu.trace_start"() <{level = 10 : i32, message = "gij,gjd->gid"}> : () -> ()
    %cst_7 = arith.constant dense<0.000000e+00> : vector<4x16x32xf32>
    %6 = tpu.matmul %0, %5, %cst_7 {dimension_numbers = #tpu.dot_dimension_numbers<[2], [1], [1], [2], [0, 0, 0, 1, 1, 2], [0], [0]>} : vector<4x16x16xf32>, vector<4x16x32xf32>, vector<4x16x32xf32> -> vector<4x16x32xf32>
    "tpu.trace_stop"() : () -> ()
    %7 = vector.shape_cast %6 : vector<4x16x32xf32> to vector<64x32xf32>
    %c0_8 = arith.constant 0 : index
    %c0_9 = arith.constant 0 : index
    %c0_10 = arith.constant 0 : index
    %8 = vector.load %arg5[%c0_8, %c0_9, %c0_10] : memref<3x1x32xf32, #tpu.memory_space<vmem>>, vector<1x1x32xf32>
    %9 = vector.shape_cast %8 : vector<1x1x32xf32> to vector<1x32xf32>
    %10 = vector.broadcast %9 : vector<1x32xf32> to vector<64x32xf32>
    %11 = arith.addf %7, %10 : vector<64x32xf32>
    %cst_11 = arith.constant 0.000000e+00 : f32
    %12 = vector.broadcast %cst_11 : f32 to vector<64x32xf32>
    %13 = arith.maximumf %11, %12 : vector<64x32xf32>
    %c1 = arith.constant 1 : index
    %c0_12 = arith.constant 0 : index
    %c0_13 = arith.constant 0 : index
    %14 = vector.load %arg4[%c1, %c0_12, %c0_13] : memref<3x32x32xf32, #tpu.memory_space<vmem>>, vector<1x32x32xf32>
    %15 = vector.shape_cast %14 : vector<1x32x32xf32> to vector<32x32xf32>
    %cst_14 = arith.constant dense<0.000000e+00> : vector<64x32xf32>
    %16 = tpu.matmul %13, %15, %cst_14 {dimension_numbers = #tpu.dot_dimension_numbers<[1], [0], [0], [1], [0, 0, 1, 1], [], []>} : vector<64x32xf32>, vector<32x32xf32>, vector<64x32xf32> -> vector<64x32xf32>
    %17 = vector.shape_cast %16 : vector<64x32xf32> to vector<4x16x32xf32>
    "tpu.trace_start"() <{level = 10 : i32, message = "gij,gjd->gid"}> : () -> ()
    %cst_15 = arith.constant dense<0.000000e+00> : vector<4x16x32xf32>
    %18 = tpu.matmul %0, %17, %cst_15 {dimension_numbers = #tpu.dot_dimension_numbers<[2], [1], [1], [2], [0, 0, 0, 1, 1, 2], [0], [0]>} : vector<4x16x16xf32>, vector<4x16x32xf32>, vector<4x16x32xf32> -> vector<4x16x32xf32>
    "tpu.trace_stop"() : () -> ()
    %19 = vector.shape_cast %18 : vector<4x16x32xf32> to vector<64x32xf32>
    %c1_16 = arith.constant 1 : index
    %c0_17 = arith.constant 0 : index
    %c0_18 = arith.constant 0 : index
    %20 = vector.load %arg5[%c1_16, %c0_17, %c0_18] : memref<3x1x32xf32, #tpu.memory_space<vmem>>, vector<1x1x32xf32>
    %21 = vector.shape_cast %20 : vector<1x1x32xf32> to vector<1x32xf32>
    %22 = vector.broadcast %21 : vector<1x32xf32> to vector<64x32xf32>
    %23 = arith.addf %19, %22 : vector<64x32xf32>
    %cst_19 = arith.constant 0.000000e+00 : f32
    %24 = vector.broadcast %cst_19 : f32 to vector<64x32xf32>
    %25 = arith.maximumf %23, %24 : vector<64x32xf32>
    %c2 = arith.constant 2 : index
    %c0_20 = arith.constant 0 : index
    %c0_21 = arith.constant 0 : index
    %26 = vector.load %arg4[%c2, %c0_20, %c0_21] : memref<3x32x32xf32, #tpu.memory_space<vmem>>, vector<1x32x32xf32>
    %27 = vector.shape_cast %26 : vector<1x32x32xf32> to vector<32x32xf32>
    %cst_22 = arith.constant dense<0.000000e+00> : vector<64x32xf32>
    %28 = tpu.matmul %25, %27, %cst_22 {dimension_numbers = #tpu.dot_dimension_numbers<[1], [0], [0], [1], [0, 0, 1, 1], [], []>} : vector<64x32xf32>, vector<32x32xf32>, vector<64x32xf32> -> vector<64x32xf32>
    %29 = vector.shape_cast %28 : vector<64x32xf32> to vector<4x16x32xf32>
    "tpu.trace_start"() <{level = 10 : i32, message = "gij,gjd->gid"}> : () -> ()
    %cst_23 = arith.constant dense<0.000000e+00> : vector<4x16x32xf32>
    %30 = tpu.matmul %0, %29, %cst_23 {dimension_numbers = #tpu.dot_dimension_numbers<[2], [1], [1], [2], [0, 0, 0, 1, 1, 2], [0], [0]>} : vector<4x16x16xf32>, vector<4x16x32xf32>, vector<4x16x32xf32> -> vector<4x16x32xf32>
    "tpu.trace_stop"() : () -> ()
    %31 = vector.shape_cast %30 : vector<4x16x32xf32> to vector<64x32xf32>
    %c2_24 = arith.constant 2 : index
    %c0_25 = arith.constant 0 : index
    %c0_26 = arith.constant 0 : index
    %32 = vector.load %arg5[%c2_24, %c0_25, %c0_26] : memref<3x1x32xf32, #tpu.memory_space<vmem>>, vector<1x1x32xf32>
    %33 = vector.shape_cast %32 : vector<1x1x32xf32> to vector<1x32xf32>
    %34 = vector.broadcast %33 : vector<1x32xf32> to vector<64x32xf32>
    %35 = arith.addf %31, %34 : vector<64x32xf32>
    %cst_27 = arith.constant 0.000000e+00 : f32
    %36 = vector.broadcast %cst_27 : f32 to vector<64x32xf32>
    %37 = arith.maximumf %35, %36 : vector<64x32xf32>
    %c0_28 = arith.constant 0 : index
    %c0_29 = arith.constant 0 : index
    %38 = vector.load %arg2[%c0_28, %c0_29] : memref<2x64xf32, #tpu.memory_space<vmem>>, vector<2x64xf32>
    %cst_30 = arith.constant dense<0.000000e+00> : vector<2x32xf32>
    %39 = tpu.matmul %38, %37, %cst_30 {dimension_numbers = #tpu.dot_dimension_numbers<[1], [0], [0], [1], [0, 0, 1, 1], [], []>} : vector<2x64xf32>, vector<64x32xf32>, vector<2x32xf32> -> vector<2x32xf32>
    %c0_31 = arith.constant 0 : index
    %c0_32 = arith.constant 0 : index
    %40 = vector.load %arg3[%c0_31, %c0_32] : memref<2x64xf32, #tpu.memory_space<vmem>>, vector<2x64xf32>
    %cst_33 = arith.constant dense<0.000000e+00> : vector<2x32xf32>
    %41 = tpu.matmul %40, %37, %cst_33 {dimension_numbers = #tpu.dot_dimension_numbers<[1], [0], [0], [1], [0, 0, 1, 1], [], []>} : vector<2x64xf32>, vector<64x32xf32>, vector<2x32xf32> -> vector<2x32xf32>
    %c0_34 = arith.constant 0 : index
    %c0_35 = arith.constant 0 : index
    %42 = vector.load %arg6[%c0_34, %c0_35] : memref<32x128xf32, #tpu.memory_space<vmem>>, vector<32x128xf32>
    %cst_36 = arith.constant dense<0.000000e+00> : vector<2x128xf32>
    %43 = tpu.matmul %39, %42, %cst_36 {dimension_numbers = #tpu.dot_dimension_numbers<[1], [0], [0], [1], [0, 0, 1, 1], [], []>} : vector<2x32xf32>, vector<32x128xf32>, vector<2x128xf32> -> vector<2x128xf32>
    %c0_37 = arith.constant 0 : index
    %c0_38 = arith.constant 0 : index
    %44 = vector.load %arg7[%c0_37, %c0_38] : memref<32x128xf32, #tpu.memory_space<vmem>>, vector<32x128xf32>
    %cst_39 = arith.constant dense<0.000000e+00> : vector<2x128xf32>
    %45 = tpu.matmul %41, %44, %cst_39 {dimension_numbers = #tpu.dot_dimension_numbers<[1], [0], [0], [1], [0, 0, 1, 1], [], []>} : vector<2x32xf32>, vector<32x128xf32>, vector<2x128xf32> -> vector<2x128xf32>
    %46 = arith.addf %43, %45 : vector<2x128xf32>
    %c0_40 = arith.constant 0 : index
    %c0_41 = arith.constant 0 : index
    %47 = vector.load %arg8[%c0_40, %c0_41] : memref<1x128xf32, #tpu.memory_space<vmem>>, vector<1x128xf32>
    %48 = vector.broadcast %47 : vector<1x128xf32> to vector<2x128xf32>
    %49 = arith.addf %46, %48 : vector<2x128xf32>
    %cst_42 = arith.constant 0.000000e+00 : f32
    %50 = vector.broadcast %cst_42 : f32 to vector<2x128xf32>
    %51 = arith.maximumf %49, %50 : vector<2x128xf32>
    %c0_43 = arith.constant 0 : index
    %c0_44 = arith.constant 0 : index
    %52 = vector.load %arg9[%c0_43, %c0_44] : memref<128x64xf32, #tpu.memory_space<vmem>>, vector<128x64xf32>
    %cst_45 = arith.constant dense<0.000000e+00> : vector<2x64xf32>
    %53 = tpu.matmul %51, %52, %cst_45 {dimension_numbers = #tpu.dot_dimension_numbers<[1], [0], [0], [1], [0, 0, 1, 1], [], []>} : vector<2x128xf32>, vector<128x64xf32>, vector<2x64xf32> -> vector<2x64xf32>
    %c0_46 = arith.constant 0 : index
    %c0_47 = arith.constant 0 : index
    %54 = vector.load %arg10[%c0_46, %c0_47] : memref<1x64xf32, #tpu.memory_space<vmem>>, vector<1x64xf32>
    %55 = vector.broadcast %54 : vector<1x64xf32> to vector<2x64xf32>
    %56 = arith.addf %53, %55 : vector<2x64xf32>
    %cst_48 = arith.constant 0.000000e+00 : f32
    %57 = vector.broadcast %cst_48 : f32 to vector<2x64xf32>
    %58 = arith.maximumf %56, %57 : vector<2x64xf32>
    %c0_49 = arith.constant 0 : index
    %c0_50 = arith.constant 0 : index
    %59 = vector.load %arg11[%c0_49, %c0_50] : memref<64x128xf32, #tpu.memory_space<vmem>>, vector<64x128xf32>
    %cst_51 = arith.constant dense<0.000000e+00> : vector<2x128xf32>
    %60 = tpu.matmul %58, %59, %cst_51 {dimension_numbers = #tpu.dot_dimension_numbers<[1], [0], [0], [1], [0, 0, 1, 1], [], []>} : vector<2x64xf32>, vector<64x128xf32>, vector<2x128xf32> -> vector<2x128xf32>
    %c0_52 = arith.constant 0 : index
    %c0_53 = arith.constant 0 : index
    %61 = vector.load %arg12[%c0_52, %c0_53] : memref<1x128xf32, #tpu.memory_space<vmem>>, vector<1x128xf32>
    %62 = vector.broadcast %61 : vector<1x128xf32> to vector<2x128xf32>
    %63 = arith.addf %60, %62 : vector<2x128xf32>
    %c0_54 = arith.constant 0 : index
    %c0_55 = arith.constant 0 : index
    %64 = vector.load %arg13[%c0_54, %c0_55] : memref<2x128xf32, #tpu.memory_space<vmem>>, vector<2x128xf32>
    tpu.vector_store %arg13[%c0_54, %c0_55], %63 {strides = array<i32>} : memref<2x128xf32, #tpu.memory_space<vmem>>, vector<2x128xf32>,
    return
  }
}

</mosaic_0001>

<llo_original>
// kernel: model001_forward.1
$region0: #{model001_forward.1}
  #allocation0 [shape = 'u32[]', space=smem, size = 0x4, offset = 0x4, fixed_abs, tag = 'smem constant byte address 0x4 - core index']
  #allocation1 [shape = 'u32[72,128]{1,0:T(1,128)}', space=vmem, size = 0x9000, scoped, tag = 'internal scratch']
  %s0 = inlined_call_operand.vmem [shape: f32[64,32], index: 0, kind: input, shape index: {}]
  %s1 = inlined_call_operand.vmem [shape: f32[4,16,16], index: 1, kind: input, shape index: {}]
  %s2 = inlined_call_operand.vmem [shape: f32[2,64], index: 2, kind: input, shape index: {}]
  %s3 = inlined_call_operand.vmem [shape: f32[2,64], index: 3, kind: input, shape index: {}]
  %s4 = inlined_call_operand.vmem [shape: f32[3,32,32], index: 4, kind: input, shape index: {}]
  %s5 = inlined_call_operand.vmem [shape: f32[3,1,32], index: 5, kind: input, shape index: {}]
  %s6 = inlined_call_operand.vmem [shape: f32[32,128], index: 6, kind: input, shape index: {}]
  %s7 = inlined_call_operand.vmem [shape: f32[32,128], index: 7, kind: input, shape index: {}]
  %s8 = inlined_call_operand.vmem [shape: f32[1,128], index: 8, kind: input, shape index: {}]
  %s9 = inlined_call_operand.vmem [shape: f32[128,64], index: 9, kind: input, shape index: {}]
  %s10 = inlined_call_operand.vmem [shape: f32[1,64], index: 10, kind: input, shape index: {}]
  %s11 = inlined_call_operand.vmem [shape: f32[64,128], index: 11, kind: input, shape index: {}]
  %s12 = inlined_call_operand.vmem [shape: f32[1,128], index: 12, kind: input, shape index: {}]
  %s13 = inlined_call_operand.vmem [shape: f32[2,128], index: 13, kind: output, shape index: {}]
  %s14 = sld [smem:[#allocation0]]
  $region62: #{model001_forward.1} parent=0
    _
  %s16 = ssub.s32 1, %s14
  %s17 = scalar_select 0, %s16, %s14
  // Predicated region
  $region2: #{model001_forward.1} parent=0 // pred_check
    _
  $region3: #{model001_forward.1} parent=0 // pred_check_branch
    %19 = sbr.rel (0) target = $region5
  $region4: #{model001_forward.1} parent=0 // pred_region
    _
  $region5: #{model001_forward.1} parent=0 // pred_fallthru
    _
  // Predicated region
  $region6: #{model001_forward.1} parent=0 // pred_check
    _
  $region7: #{model001_forward.1} parent=0 // pred_check_branch
    %21 = sbr.rel (0) target = $region9
  $region8: #{model001_forward.1} parent=0 // pred_region
    _
  $region9: #{model001_forward.1} parent=0 // pred_fallthru
    _
  // Predicated region
  $region10: #{model001_forward.1} parent=0 // pred_check
    _
  $region11: #{model001_forward.1} parent=0 // pred_check_branch
    %23 = sbr.rel (0) target = $region13
  $region12: #{model001_forward.1} parent=0 // pred_region
    _
  $region13: #{model001_forward.1} parent=0 // pred_fallthru
    _
  // Predicated region
  $region14: #{model001_forward.1} parent=0 // pred_check
    _
  $region15: #{model001_forward.1} parent=0 // pred_check_branch
    %25 = sbr.rel (0) target = $region17
  $region16: #{model001_forward.1} parent=0 // pred_region
    _
  $region17: #{model001_forward.1} parent=0 // pred_fallthru
    _
  // Predicated region
  $region18: #{model001_forward.1} parent=0 // pred_check
    _
  $region19: #{model001_forward.1} parent=0 // pred_check_branch
    %27 = sbr.rel (0) target = $region21
  $region20: #{model001_forward.1} parent=0 // pred_region
    _
  $region21: #{model001_forward.1} parent=0 // pred_fallthru
    _
  // Predicated region
  $region22: #{model001_forward.1} parent=0 // pred_check
    _
  $region23: #{model001_forward.1} parent=0 // pred_check_branch
    %29 = sbr.rel (0) target = $region25
  $region24: #{model001_forward.1} parent=0 // pred_region
    _
  $region25: #{model001_forward.1} parent=0 // pred_fallthru
    _
  // Predicated region
  $region26: #{model001_forward.1} parent=0 // pred_check
    _
  $region27: #{model001_forward.1} parent=0 // pred_check_branch
    %31 = sbr.rel (0) target = $region29
  $region28: #{model001_forward.1} parent=0 // pred_region
    _
  $region29: #{model001_forward.1} parent=0 // pred_fallthru
    _
  // Predicated region
  $region30: #{model001_forward.1} parent=0 // pred_check
    _
  $region31: #{model001_forward.1} parent=0 // pred_check_branch
    %33 = sbr.rel (0) target = $region33
  $region32: #{model001_forward.1} parent=0 // pred_region
    _
  $region33: #{model001_forward.1} parent=0 // pred_fallthru
    _
  // Predicated region
  $region34: #{model001_forward.1} parent=0 // pred_check
    _
  $region35: #{model001_forward.1} parent=0 // pred_check_branch
    %35 = sbr.rel (0) target = $region37
  $region36: #{model001_forward.1} parent=0 // pred_region
    _
  $region37: #{model001_forward.1} parent=0 // pred_fallthru
    _
  // Predicated region
  $region38: #{model001_forward.1} parent=0 // pred_check
    _
  $region39: #{model001_forward.1} parent=0 // pred_check_branch
    %37 = sbr.rel (0) target = $region41
  $region40: #{model001_forward.1} parent=0 // pred_region
    _
  $region41: #{model001_forward.1} parent=0 // pred_fallthru
    _
  // Predicated region
  $region42: #{model001_forward.1} parent=0 // pred_check
    _
  $region43: #{model001_forward.1} parent=0 // pred_check_branch
    %39 = sbr.rel (0) target = $region45
  $region44: #{model001_forward.1} parent=0 // pred_region
    _
  $region45: #{model001_forward.1} parent=0 // pred_fallthru
    _
  // Predicated region
  $region46: #{model001_forward.1} parent=0 // pred_check
    _
  $region47: #{model001_forward.1} parent=0 // pred_check_branch
    %41 = sbr.rel (0) target = $region49
  $region48: #{model001_forward.1} parent=0 // pred_region
    _
  $region49: #{model001_forward.1} parent=0 // pred_fallthru
    _
  // Predicated region
  $region50: #{model001_forward.1} parent=0 // pred_check
    _
  $region51: #{model001_forward.1} parent=0 // pred_check_branch
    %43 = sbr.rel (0) target = $region53
  $region52: #{model001_forward.1} parent=0 // pred_region
    _
  $region53: #{model001_forward.1} parent=0 // pred_fallthru
    _
  %v44 = vld [vmem:[%s1] sm:$0xff]
  %v45 = vld [vmem:[%s1 + $0x8] sm:$0xff]
  %v46 = vld [vmem:[%s1 + $0x10] sm:$0xff]
  %v47 = vld [vmem:[%s1 + $0x18] sm:$0xff]
  %v48 = vld [vmem:[%s1 + $0x20] sm:$0xff]
  %v49 = vld [vmem:[%s1 + $0x28] sm:$0xff]
  %v50 = vld [vmem:[%s1 + $0x30] sm:$0xff]
  %v51 = vld [vmem:[%s1 + $0x38] sm:$0xff]
  %v52 = vld [vmem:[%s0] sm:$0xff]
  %v53 = vld [vmem:[%s0 + $0x8] sm:$0xff]
  %v54 = vld [vmem:[%s0 + $0x10] sm:$0xff]
  %v55 = vld [vmem:[%s0 + $0x18] sm:$0xff]
  %v56 = vld [vmem:[%s0 + $0x20] sm:$0xff]
  %v57 = vld [vmem:[%s0 + $0x28] sm:$0xff]
  %v58 = vld [vmem:[%s0 + $0x30] sm:$0xff]
  %v59 = vld [vmem:[%s0 + $0x38] sm:$0xff]
  %v60 = vld [vmem:[%s4] sm:$0xff]
  %v61 = vld [vmem:[%s4 + $0x8] sm:$0xff]
  %v62 = vld [vmem:[%s4 + $0x10] sm:$0xff]
  %v63 = vld [vmem:[%s4 + $0x18] sm:$0xff]
  %vm64 = vcmask 261120
  %v66 = vsel %vm64, %v52, 0
  %v69 = vsel %vm64, %v53, 0
  %v72 = vsel %vm64, %v54, 0
  %v75 = vsel %vm64, %v55, 0
  %v78 = vsel %vm64, %v56, 0
  %v81 = vsel %vm64, %v57, 0
  %v84 = vsel %vm64, %v58, 0
  %v87 = vsel %vm64, %v59, 0
  %89 = vmatpush.msra.mxu0 0.0
  %90 = vmatpush.msra.mxu0 0.0
  %91 = vmatpush.msra.mxu0 0.0
  %92 = vmatpush.msra.mxu0 0.0
  %93 = vmatpush.msra.mxu0 0.0
  %94 = vmatpush.msra.mxu0 0.0
  %95 = vmatpush.msra.mxu0 0.0
  %96 = vmatpush.msra.mxu0 0.0
  %97 = vmatpush.msra.mxu0 0.0
  %98 = vmatpush.msra.mxu0 0.0
  %99 = vmatpush.msra.mxu0 0.0
  %100 = vmatpush.msra.mxu0 0.0
  %101 = vmatpush.msra.mxu0 %v63
  %102 = vmatpush.msra.mxu0 %v62
  %103 = vmatpush.msra.mxu0 %v61
  %104 = vmatpush.msra.mxu0 %v60
  %105 = vmatmul.f32.gmra.mxu0 %v66
  %v106 = vpop.f32.mrf.mxu0
  %v107 = vadd.f32 0.0, %v106
  %108 = vmatmul.f32.gmra.mxu0 %v69
  %v109 = vpop.f32.mrf.mxu0
  %v110 = vadd.f32 0.0, %v109
  %111 = vmatmul.f32.gmra.mxu0 %v72
  %v112 = vpop.f32.mrf.mxu0
  %v113 = vadd.f32 0.0, %v112
  %114 = vmatmul.f32.gmra.mxu0 %v75
  %v115 = vpop.f32.mrf.mxu0
  %v116 = vadd.f32 0.0, %v115
  %117 = vmatmul.f32.gmra.mxu0 %v78
  %v118 = vpop.f32.mrf.mxu0
  %v119 = vadd.f32 0.0, %v118
  %120 = vmatmul.f32.gmra.mxu0 %v81
  %v121 = vpop.f32.mrf.mxu0
  %v122 = vadd.f32 0.0, %v121
  %123 = vmatmul.f32.gmra.mxu0 %v84
  %v124 = vpop.f32.mrf.mxu0
  %v125 = vadd.f32 0.0, %v124
  %126 = vmatmul.f32.gmra.mxu0 %v87
  %v127 = vpop.f32.mrf.mxu0
  %v128 = vadd.f32 0.0, %v127
  %129 = vdwg.mxu0
  %vm130 = vcmask 130048
  %v132 = vsel %vm130, %v44, 0
  %v135 = vsel %vm130, %v45, 0
  %137 = vmatpush.msra.mxu0 0.0
  %138 = vmatpush.msra.mxu0 0.0
  %139 = vmatpush.msra.mxu0 0.0
  %140 = vmatpush.msra.mxu0 0.0
  %141 = vmatpush.msra.mxu0 0.0
  %142 = vmatpush.msra.mxu0 0.0
  %143 = vmatpush.msra.mxu0 0.0
  %144 = vmatpush.msra.mxu0 0.0
  %145 = vmatpush.msra.mxu0 0.0
  %146 = vmatpush.msra.mxu0 0.0
  %147 = vmatpush.msra.mxu0 0.0
  %148 = vmatpush.msra.mxu0 0.0
  %149 = vmatpush.msra.mxu0 0.0
  %150 = vmatpush.msra.mxu0 0.0
  %151 = vmatpush.msra.mxu0 %v110
  %152 = vmatpush.msra.mxu0 %v107
  %153 = vmatmul.f32.gmra.mxu0 %v132
  %v154 = vpop.f32.mrf.mxu0
  %v155 = vadd.f32 0.0, %v154
  %156 = vmatmul.f32.gmra.mxu0 %v135
  %v157 = vpop.f32.mrf.mxu0
  %v158 = vadd.f32 0.0, %v157
  %159 = vdwg.mxu0
  %v161 = vsel %vm130, %v46, 0
  %v164 = vsel %vm130, %v47, 0
  %166 = vmatpush.msra.mxu0 0.0
  %167 = vmatpush.msra.mxu0 0.0
  %168 = vmatpush.msra.mxu0 0.0
  %169 = vmatpush.msra.mxu0 0.0
  %170 = vmatpush.msra.mxu0 0.0
  %171 = vmatpush.msra.mxu0 0.0
  %172 = vmatpush.msra.mxu0 0.0
  %173 = vmatpush.msra.mxu0 0.0
  %174 = vmatpush.msra.mxu0 0.0
  %175 = vmatpush.msra.mxu0 0.0
  %176 = vmatpush.msra.mxu0 0.0
  %177 = vmatpush.msra.mxu0 0.0
  %178 = vmatpush.msra.mxu0 0.0
  %179 = vmatpush.msra.mxu0 0.0
  %180 = vmatpush.msra.mxu0 %v116
  %181 = vmatpush.msra.mxu0 %v113
  %182 = vmatmul.f32.gmra.mxu0 %v161
  %v183 = vpop.f32.mrf.mxu0
  %v184 = vadd.f32 0.0, %v183
  %185 = vmatmul.f32.gmra.mxu0 %v164
  %v186 = vpop.f32.mrf.mxu0
  %v187 = vadd.f32 0.0, %v186
  %188 = vdwg.mxu0
  %v190 = vsel %vm130, %v48, 0
  %v193 = vsel %vm130, %v49, 0
  %195 = vmatpush.msra.mxu0 0.0
  %196 = vmatpush.msra.mxu0 0.0
  %197 = vmatpush.msra.mxu0 0.0
  %198 = vmatpush.msra.mxu0 0.0
  %199 = vmatpush.msra.mxu0 0.0
  %200 = vmatpush.msra.mxu0 0.0
  %201 = vmatpush.msra.mxu0 0.0
  %202 = vmatpush.msra.mxu0 0.0
  %203 = vmatpush.msra.mxu0 0.0
  %204 = vmatpush.msra.mxu0 0.0
  %205 = vmatpush.msra.mxu0 0.0
  %206 = vmatpush.msra.mxu0 0.0
  %207 = vmatpush.msra.mxu0 0.0
  %208 = vmatpush.msra.mxu0 0.0
  %209 = vmatpush.msra.mxu0 %v122
  %210 = vmatpush.msra.mxu0 %v119
  %211 = vmatmul.f32.gmra.mxu0 %v190
  %v212 = vpop.f32.mrf.mxu0
  %v213 = vadd.f32 0.0, %v212
  %214 = vmatmul.f32.gmra.mxu0 %v193
  %v215 = vpop.f32.mrf.mxu0
  %v216 = vadd.f32 0.0, %v215
  %217 = vdwg.mxu0
  %v219 = vsel %vm130, %v50, 0
  %v222 = vsel %vm130, %v51, 0
  %224 = vmatpush.msra.mxu0 0.0
  %225 = vmatpush.msra.mxu0 0.0
  %226 = vmatpush.msra.mxu0 0.0
  %227 = vmatpush.msra.mxu0 0.0
  %228 = vmatpush.msra.mxu0 0.0
  %229 = vmatpush.msra.mxu0 0.0
  %230 = vmatpush.msra.mxu0 0.0
  %231 = vmatpush.msra.mxu0 0.0
  %232 = vmatpush.msra.mxu0 0.0
  %233 = vmatpush.msra.mxu0 0.0
  %234 = vmatpush.msra.mxu0 0.0
  %235 = vmatpush.msra.mxu0 0.0
  %236 = vmatpush.msra.mxu0 0.0
  %237 = vmatpush.msra.mxu0 0.0
  %238 = vmatpush.msra.mxu0 %v128
  %239 = vmatpush.msra.mxu0 %v125
  %240 = vmatmul.f32.gmra.mxu0 %v219
  %v241 = vpop.f32.mrf.mxu0
  %v242 = vadd.f32 0.0, %v241
  %243 = vmatmul.f32.gmra.mxu0 %v222
  %v244 = vpop.f32.mrf.mxu0
  %v245 = vadd.f32 0.0, %v244
  %246 = vdwg.mxu0
  %v247 = vld [vmem:[%s5] sm:$0x1]
  %v249 = vperm.slane %v247, 0
  %v251 = vadd.f32 %v155, %v249
  %v252 = vadd.f32 %v158, %v249
  %v253 = vadd.f32 %v184, %v249
  %v254 = vadd.f32 %v187, %v249
  %v255 = vadd.f32 %v213, %v249
  %v256 = vadd.f32 %v216, %v249
  %v257 = vadd.f32 %v242, %v249
  %v258 = vadd.f32 %v245, %v249
  %v259 = vmax.f32 %v251, 0.0
  %v260 = vmax.f32 %v252, 0.0
  %v261 = vmax.f32 %v253, 0.0
  %v262 = vmax.f32 %v254, 0.0
  %v263 = vmax.f32 %v255, 0.0
  %v264 = vmax.f32 %v256, 0.0
  %v265 = vmax.f32 %v257, 0.0
  %v266 = vmax.f32 %v258, 0.0
  %s267 = scalar_lea.vmem %s4, 32
  %v268 = vld [vmem:[%s267] sm:$0xff]
  %v269 = vld [vmem:[%s267 + $0x8] sm:$0xff]
  %v270 = vld [vmem:[%s267 + $0x10] sm:$0xff]
  %v271 = vld [vmem:[%s267 + $0x18] sm:$0xff]
  %v273 = vsel %vm64, %v259, 0
  %v276 = vsel %vm64, %v260, 0
  %v279 = vsel %vm64, %v261, 0
  %v282 = vsel %vm64, %v262, 0
  %v285 = vsel %vm64, %v263, 0
  %v288 = vsel %vm64, %v264, 0
  %v291 = vsel %vm64, %v265, 0
  %v294 = vsel %vm64, %v266, 0
  %296 = vmatpush.msra.mxu0 0.0
  %297 = vmatpush.msra.mxu0 0.0
  %298 = vmatpush.msra.mxu0 0.0
  %299 = vmatpush.msra.mxu0 0.0
  %300 = vmatpush.msra.mxu0 0.0
  %301 = vmatpush.msra.mxu0 0.0
  %302 = vmatpush.msra.mxu0 0.0
  %303 = vmatpush.msra.mxu0 0.0
  %304 = vmatpush.msra.mxu0 0.0
  %305 = vmatpush.msra.mxu0 0.0
  %306 = vmatpush.msra.mxu0 0.0
  %307 = vmatpush.msra.mxu0 0.0
  %308 = vmatpush.msra.mxu0 %v271
  %309 = vmatpush.msra.mxu0 %v270
  %310 = vmatpush.msra.mxu0 %v269
  %311 = vmatpush.msra.mxu0 %v268
  %312 = vmatmul.f32.gmra.mxu0 %v273
  %v313 = vpop.f32.mrf.mxu0
  %v314 = vadd.f32 0.0, %v313
  %315 = vmatmul.f32.gmra.mxu0 %v276
  %v316 = vpop.f32.mrf.mxu0
  %v317 = vadd.f32 0.0, %v316
  %318 = vmatmul.f32.gmra.mxu0 %v279
  %v319 = vpop.f32.mrf.mxu0
  %v320 = vadd.f32 0.0, %v319
  %321 = vmatmul.f32.gmra.mxu0 %v282
  %v322 = vpop.f32.mrf.mxu0
  %v323 = vadd.f32 0.0, %v322
  %324 = vmatmul.f32.gmra.mxu0 %v285
  %v325 = vpop.f32.mrf.mxu0
  %v326 = vadd.f32 0.0, %v325
  %327 = vmatmul.f32.gmra.mxu0 %v288
  %v328 = vpop.f32.mrf.mxu0
  %v329 = vadd.f32 0.0, %v328
  %330 = vmatmul.f32.gmra.mxu0 %v291
  %v331 = vpop.f32.mrf.mxu0
  %v332 = vadd.f32 0.0, %v331
  %333 = vmatmul.f32.gmra.mxu0 %v294
  %v334 = vpop.f32.mrf.mxu0
  %v335 = vadd.f32 0.0, %v334
  %336 = vdwg.mxu0
  %337 = vmatpush.msra.mxu0 0.0
  %338 = vmatpush.msra.mxu0 0.0
  %339 = vmatpush.msra.mxu0 0.0
  %340 = vmatpush.msra.mxu0 0.0
  %341 = vmatpush.msra.mxu0 0.0
  %342 = vmatpush.msra.mxu0 0.0
  %343 = vmatpush.msra.mxu0 0.0
  %344 = vmatpush.msra.mxu0 0.0
  %345 = vmatpush.msra.mxu0 0.0
  %346 = vmatpush.msra.mxu0 0.0
  %347 = vmatpush.msra.mxu0 0.0
  %348 = vmatpush.msra.mxu0 0.0
  %349 = vmatpush.msra.mxu0 0.0
  %350 = vmatpush.msra.mxu0 0.0
  %351 = vmatpush.msra.mxu0 %v317
  %352 = vmatpush.msra.mxu0 %v314
  %353 = vmatmul.f32.gmra.mxu0 %v132
  %v354 = vpop.f32.mrf.mxu0
  %v355 = vadd.f32 0.0, %v354
  %356 = vmatmul.f32.gmra.mxu0 %v135
  %v357 = vpop.f32.mrf.mxu0
  %v358 = vadd.f32 0.0, %v357
  %359 = vdwg.mxu0
  %360 = vmatpush.msra.mxu0 0.0
  %361 = vmatpush.msra.mxu0 0.0
  %362 = vmatpush.msra.mxu0 0.0
  %363 = vmatpush.msra.mxu0 0.0
  %364 = vmatpush.msra.mxu0 0.0
  %365 = vmatpush.msra.mxu0 0.0
  %366 = vmatpush.msra.mxu0 0.0
  %367 = vmatpush.msra.mxu0 0.0
  %368 = vmatpush.msra.mxu0 0.0
  %369 = vmatpush.msra.mxu0 0.0
  %370 = vmatpush.msra.mxu0 0.0
  %371 = vmatpush.msra.mxu0 0.0
  %372 = vmatpush.msra.mxu0 0.0
  %373 = vmatpush.msra.mxu0 0.0
  %374 = vmatpush.msra.mxu0 %v323
  %375 = vmatpush.msra.mxu0 %v320
  %376 = vmatmul.f32.gmra.mxu0 %v161
  %v377 = vpop.f32.mrf.mxu0
  %v378 = vadd.f32 0.0, %v377
  %379 = vmatmul.f32.gmra.mxu0 %v164
  %v380 = vpop.f32.mrf.mxu0
  %v381 = vadd.f32 0.0, %v380
  %382 = vdwg.mxu0
  %383 = vmatpush.msra.mxu0 0.0
  %384 = vmatpush.msra.mxu0 0.0
  %385 = vmatpush.msra.mxu0 0.0
  %386 = vmatpush.msra.mxu0 0.0
  %387 = vmatpush.msra.mxu0 0.0
  %388 = vmatpush.msra.mxu0 0.0
  %389 = vmatpush.msra.mxu0 0.0
  %390 = vmatpush.msra.mxu0 0.0
  %391 = vmatpush.msra.mxu0 0.0
  %392 = vmatpush.msra.mxu0 0.0
  %393 = vmatpush.msra.mxu0 0.0
  %394 = vmatpush.msra.mxu0 0.0
  %395 = vmatpush.msra.mxu0 0.0
  %396 = vmatpush.msra.mxu0 0.0
  %397 = vmatpush.msra.mxu0 %v329
  %398 = vmatpush.msra.mxu0 %v326
  %399 = vmatmul.f32.gmra.mxu0 %v190
  %v400 = vpop.f32.mrf.mxu0
  %v401 = vadd.f32 0.0, %v400
  %402 = vmatmul.f32.gmra.mxu0 %v193
  %v403 = vpop.f32.mrf.mxu0
  %v404 = vadd.f32 0.0, %v403
  %405 = vdwg.mxu0
  %406 = vmatpush.msra.mxu0 0.0
  %407 = vmatpush.msra.mxu0 0.0
  %408 = vmatpush.msra.mxu0 0.0
  %409 = vmatpush.msra.mxu0 0.0
  %410 = vmatpush.msra.mxu0 0.0
  %411 = vmatpush.msra.mxu0 0.0
  %412 = vmatpush.msra.mxu0 0.0
  %413 = vmatpush.msra.mxu0 0.0
  %414 = vmatpush.msra.mxu0 0.0
  %415 = vmatpush.msra.mxu0 0.0
  %416 = vmatpush.msra.mxu0 0.0
  %417 = vmatpush.msra.mxu0 0.0
  %418 = vmatpush.msra.mxu0 0.0
  %419 = vmatpush.msra.mxu0 0.0
  %420 = vmatpush.msra.mxu0 %v335
  %421 = vmatpush.msra.mxu0 %v332
  %422 = vmatmul.f32.gmra.mxu0 %v219
  %v423 = vpop.f32.mrf.mxu0
  %v424 = vadd.f32 0.0, %v423
  %425 = vmatmul.f32.gmra.mxu0 %v222
  %v426 = vpop.f32.mrf.mxu0
  %v427 = vadd.f32 0.0, %v426
  %428 = vdwg.mxu0
  %s429 = scalar_lea.vmem %s5, 1
  %v430 = vld [vmem:[%s429] sm:$0x1]
  %v432 = vperm.slane %v430, 0
  %v434 = vadd.f32 %v355, %v432
  %v435 = vadd.f32 %v358, %v432
  %v436 = vadd.f32 %v378, %v432
  %v437 = vadd.f32 %v381, %v432
  %v438 = vadd.f32 %v401, %v432
  %v439 = vadd.f32 %v404, %v432
  %v440 = vadd.f32 %v424, %v432
  %v441 = vadd.f32 %v427, %v432
  %v442 = vmax.f32 %v434, 0.0
  %v443 = vmax.f32 %v435, 0.0
  %v444 = vmax.f32 %v436, 0.0
  %v445 = vmax.f32 %v437, 0.0
  %v446 = vmax.f32 %v438, 0.0
  %v447 = vmax.f32 %v439, 0.0
  %v448 = vmax.f32 %v440, 0.0
  %v449 = vmax.f32 %v441, 0.0
  %s450 = scalar_lea.vmem %s4, 64
  %v451 = vld [vmem:[%s450] sm:$0xff]
  %v452 = vld [vmem:[%s450 + $0x8] sm:$0xff]
  %v453 = vld [vmem:[%s450 + $0x10] sm:$0xff]
  %v454 = vld [vmem:[%s450 + $0x18] sm:$0xff]
  %v456 = vsel %vm64, %v442, 0
  %v459 = vsel %vm64, %v443, 0
  %v462 = vsel %vm64, %v444, 0
  %v465 = vsel %vm64, %v445, 0
  %v468 = vsel %vm64, %v446, 0
  %v471 = vsel %vm64, %v447, 0
  %v474 = vsel %vm64, %v448, 0
  %v477 = vsel %vm64, %v449, 0
  %479 = vmatpush.msra.mxu0 0.0
  %480 = vmatpush.msra.mxu0 0.0
  %481 = vmatpush.msra.mxu0 0.0
  %482 = vmatpush.msra.mxu0 0.0
  %483 = vmatpush.msra.mxu0 0.0
  %484 = vmatpush.msra.mxu0 0.0
  %485 = vmatpush.msra.mxu0 0.0
  %486 = vmatpush.msra.mxu0 0.0
  %487 = vmatpush.msra.mxu0 0.0
  %488 = vmatpush.msra.mxu0 0.0
  %489 = vmatpush.msra.mxu0 0.0
  %490 = vmatpush.msra.mxu0 0.0
  %491 = vmatpush.msra.mxu0 %v454
  %492 = vmatpush.msra.mxu0 %v453
  %493 = vmatpush.msra.mxu0 %v452
  %494 = vmatpush.msra.mxu0 %v451
  %495 = vmatmul.f32.gmra.mxu0 %v456
  %v496 = vpop.f32.mrf.mxu0
  %v497 = vadd.f32 0.0, %v496
  %498 = vmatmul.f32.gmra.mxu0 %v459
  %v499 = vpop.f32.mrf.mxu0
  %v500 = vadd.f32 0.0, %v499
  %501 = vmatmul.f32.gmra.mxu0 %v462
  %v502 = vpop.f32.mrf.mxu0
  %v503 = vadd.f32 0.0, %v502
  %504 = vmatmul.f32.gmra.mxu0 %v465
  %v505 = vpop.f32.mrf.mxu0
  %v506 = vadd.f32 0.0, %v505
  %507 = vmatmul.f32.gmra.mxu0 %v468
  %v508 = vpop.f32.mrf.mxu0
  %v509 = vadd.f32 0.0, %v508
  %510 = vmatmul.f32.gmra.mxu0 %v471
  %v511 = vpop.f32.mrf.mxu0
  %v512 = vadd.f32 0.0, %v511
  %513 = vmatmul.f32.gmra.mxu0 %v474
  %v514 = vpop.f32.mrf.mxu0
  %v515 = vadd.f32 0.0, %v514
  %516 = vmatmul.f32.gmra.mxu0 %v477
  %v517 = vpop.f32.mrf.mxu0
  %v518 = vadd.f32 0.0, %v517
  %519 = vdwg.mxu0
  %520 = vmatpush.msra.mxu0 0.0
  %521 = vmatpush.msra.mxu0 0.0
  %522 = vmatpush.msra.mxu0 0.0
  %523 = vmatpush.msra.mxu0 0.0
  %524 = vmatpush.msra.mxu0 0.0
  %525 = vmatpush.msra.mxu0 0.0
  %526 = vmatpush.msra.mxu0 0.0
  %527 = vmatpush.msra.mxu0 0.0
  %528 = vmatpush.msra.mxu0 0.0
  %529 = vmatpush.msra.mxu0 0.0
  %530 = vmatpush.msra.mxu0 0.0
  %531 = vmatpush.msra.mxu0 0.0
  %532 = vmatpush.msra.mxu0 0.0
  %533 = vmatpush.msra.mxu0 0.0
  %534 = vmatpush.msra.mxu0 %v500
  %535 = vmatpush.msra.mxu0 %v497
  %536 = vmatmul.f32.gmra.mxu0 %v132
  %v537 = vpop.f32.mrf.mxu0
  %v538 = vadd.f32 0.0, %v537
  %539 = vmatmul.f32.gmra.mxu0 %v135
  %v540 = vpop.f32.mrf.mxu0
  %v541 = vadd.f32 0.0, %v540
  %542 = vdwg.mxu0
  %543 = vmatpush.msra.mxu0 0.0
  %544 = vmatpush.msra.mxu0 0.0
  %545 = vmatpush.msra.mxu0 0.0
  %546 = vmatpush.msra.mxu0 0.0
  %547 = vmatpush.msra.mxu0 0.0
  %548 = vmatpush.msra.mxu0 0.0
  %549 = vmatpush.msra.mxu0 0.0
  %550 = vmatpush.msra.mxu0 0.0
  %551 = vmatpush.msra.mxu0 0.0
  %552 = vmatpush.msra.mxu0 0.0
  %553 = vmatpush.msra.mxu0 0.0
  %554 = vmatpush.msra.mxu0 0.0
  %555 = vmatpush.msra.mxu0 0.0
  %556 = vmatpush.msra.mxu0 0.0
  %557 = vmatpush.msra.mxu0 %v506
  %558 = vmatpush.msra.mxu0 %v503
  %559 = vmatmul.f32.gmra.mxu0 %v161
  %v560 = vpop.f32.mrf.mxu0
  %v561 = vadd.f32 0.0, %v560
  %562 = vmatmul.f32.gmra.mxu0 %v164
  %v563 = vpop.f32.mrf.mxu0
  %v564 = vadd.f32 0.0, %v563
  %565 = vdwg.mxu0
  %566 = vmatpush.msra.mxu0 0.0
  %567 = vmatpush.msra.mxu0 0.0
  %568 = vmatpush.msra.mxu0 0.0
  %569 = vmatpush.msra.mxu0 0.0
  %570 = vmatpush.msra.mxu0 0.0
  %571 = vmatpush.msra.mxu0 0.0
  %572 = vmatpush.msra.mxu0 0.0
  %573 = vmatpush.msra.mxu0 0.0
  %574 = vmatpush.msra.mxu0 0.0
  %575 = vmatpush.msra.mxu0 0.0
  %576 = vmatpush.msra.mxu0 0.0
  %577 = vmatpush.msra.mxu0 0.0
  %578 = vmatpush.msra.mxu0 0.0
  %579 = vmatpush.msra.mxu0 0.0
  %580 = vmatpush.msra.mxu0 %v512
  %581 = vmatpush.msra.mxu0 %v509
  %582 = vmatmul.f32.gmra.mxu0 %v190
  %v583 = vpop.f32.mrf.mxu0
  %v584 = vadd.f32 0.0, %v583
  %585 = vmatmul.f32.gmra.mxu0 %v193
  %v586 = vpop.f32.mrf.mxu0
  %v587 = vadd.f32 0.0, %v586
  %588 = vdwg.mxu0
  %589 = vmatpush.msra.mxu0 0.0
  %590 = vmatpush.msra.mxu0 0.0
  %591 = vmatpush.msra.mxu0 0.0
  %592 = vmatpush.msra.mxu0 0.0
  %593 = vmatpush.msra.mxu0 0.0
  %594 = vmatpush.msra.mxu0 0.0
  %595 = vmatpush.msra.mxu0 0.0
  %596 = vmatpush.msra.mxu0 0.0
  %597 = vmatpush.msra.mxu0 0.0
  %598 = vmatpush.msra.mxu0 0.0
  %599 = vmatpush.msra.mxu0 0.0
  %600 = vmatpush.msra.mxu0 0.0
  %601 = vmatpush.msra.mxu0 0.0
  %602 = vmatpush.msra.mxu0 0.0
  %603 = vmatpush.msra.mxu0 %v518
  %604 = vmatpush.msra.mxu0 %v515
  %605 = vmatmul.f32.gmra.mxu0 %v219
  %v606 = vpop.f32.mrf.mxu0
  %v607 = vadd.f32 0.0, %v606
  %608 = vmatmul.f32.gmra.mxu0 %v222
  %v609 = vpop.f32.mrf.mxu0
  %v610 = vadd.f32 0.0, %v609
  %611 = vdwg.mxu0
  %s612 = scalar_lea.vmem %s5, 2
  %v613 = vld [vmem:[%s612] sm:$0x1]
  %v615 = vperm.slane %v613, 0
  %v617 = vadd.f32 %v538, %v615
  %v618 = vadd.f32 %v541, %v615
  %v619 = vadd.f32 %v561, %v615
  %v620 = vadd.f32 %v564, %v615
  %v621 = vadd.f32 %v584, %v615
  %v622 = vadd.f32 %v587, %v615
  %v623 = vadd.f32 %v607, %v615
  %v624 = vadd.f32 %v610, %v615
  %v625 = vmax.f32 %v617, 0.0
  %v626 = vmax.f32 %v618, 0.0
  %v627 = vmax.f32 %v619, 0.0
  %v628 = vmax.f32 %v620, 0.0
  %v629 = vmax.f32 %v621, 0.0
  %v630 = vmax.f32 %v622, 0.0
  %v631 = vmax.f32 %v623, 0.0
  %v632 = vmax.f32 %v624, 0.0
  %v633 = vld [vmem:[%s2] sm:$0x3]
  %vm634 = vcmask 523264
  %v636 = vsel %vm634, %v633, 0
  %638 = vmatpush.msra.mxu0 0.0
  %639 = vmatpush.msra.mxu0 0.0
  %640 = vmatpush.msra.mxu0 0.0
  %641 = vmatpush.msra.mxu0 0.0
  %642 = vmatpush.msra.mxu0 0.0
  %643 = vmatpush.msra.mxu0 0.0
  %644 = vmatpush.msra.mxu0 0.0
  %645 = vmatpush.msra.mxu0 0.0
  %646 = vmatpush.msra.mxu0 %v632
  %647 = vmatpush.msra.mxu0 %v631
  %648 = vmatpush.msra.mxu0 %v630
  %649 = vmatpush.msra.mxu0 %v629
  %650 = vmatpush.msra.mxu0 %v628
  %651 = vmatpush.msra.mxu0 %v627
  %652 = vmatpush.msra.mxu0 %v626
  %653 = vmatpush.msra.mxu0 %v625
  %654 = vmatmul.f32.gmra.mxu0 %v636
  %v655 = vpop.f32.mrf.mxu0
  %v656 = vadd.f32 0.0, %v655
  %657 = vdwg.mxu0
  %v658 = vld [vmem:[%s3] sm:$0x3]
  %v660 = vsel %vm634, %v658, 0
  %662 = vmatpush.msra.mxu0 0.0
  %663 = vmatpush.msra.mxu0 0.0
  %664 = vmatpush.msra.mxu0 0.0
  %665 = vmatpush.msra.mxu0 0.0
  %666 = vmatpush.msra.mxu0 0.0
  %667 = vmatpush.msra.mxu0 0.0
  %668 = vmatpush.msra.mxu0 0.0
  %669 = vmatpush.msra.mxu0 0.0
  %670 = vmatpush.msra.mxu0 %v632
  %671 = vmatpush.msra.mxu0 %v631
  %672 = vmatpush.msra.mxu0 %v630
  %673 = vmatpush.msra.mxu0 %v629
  %674 = vmatpush.msra.mxu0 %v628
  %675 = vmatpush.msra.mxu0 %v627
  %676 = vmatpush.msra.mxu0 %v626
  %677 = vmatpush.msra.mxu0 %v625
  %678 = vmatmul.f32.gmra.mxu0 %v660
  %v679 = vpop.f32.mrf.mxu0
  %v680 = vadd.f32 0.0, %v679
  %681 = vdwg.mxu0
  %v682 = vld [vmem:[%s6] sm:$0xff]
  %v683 = vld [vmem:[%s6 + $0x8] sm:$0xff]
  %v684 = vld [vmem:[%s6 + $0x10] sm:$0xff]
  %v685 = vld [vmem:[%s6 + $0x18] sm:$0xff]
  %v686 = vld [vmem:[%s7] sm:$0xff]
  %v687 = vld [vmem:[%s7 + $0x8] sm:$0xff]
  %v688 = vld [vmem:[%s7 + $0x10] sm:$0xff]
  %v689 = vld [vmem:[%s7 + $0x18] sm:$0xff]
  %v691 = vsel %vm64, %v680, 0
  %693 = vmatpush.msra.mxu0 0.0
  %694 = vmatpush.msra.mxu0 0.0
  %695 = vmatpush.msra.mxu0 0.0
  %696 = vmatpush.msra.mxu0 0.0
  %697 = vmatpush.msra.mxu0 0.0
  %698 = vmatpush.msra.mxu0 0.0
  %699 = vmatpush.msra.mxu0 0.0
  %700 = vmatpush.msra.mxu0 0.0
  %701 = vmatpush.msra.mxu0 0.0
  %702 = vmatpush.msra.mxu0 0.0
  %703 = vmatpush.msra.mxu0 0.0
  %704 = vmatpush.msra.mxu0 0.0
  %705 = vmatpush.msra.mxu0 %v689
  %706 = vmatpush.msra.mxu0 %v688
  %707 = vmatpush.msra.mxu0 %v687
  %708 = vmatpush.msra.mxu0 %v686
  %709 = vmatmul.f32.gmra.mxu0 %v691
  %v710 = vpop.f32.mrf.mxu0
  %v711 = vadd.f32 0.0, %v710
  %712 = vdwg.mxu0
  %v714 = vsel %vm64, %v656, 0
  %716 = vmatpush.msra.mxu0 0.0
  %717 = vmatpush.msra.mxu0 0.0
  %718 = vmatpush.msra.mxu0 0.0
  %719 = vmatpush.msra.mxu0 0.0
  %720 = vmatpush.msra.mxu0 0.0
  %721 = vmatpush.msra.mxu0 0.0
  %722 = vmatpush.msra.mxu0 0.0
  %723 = vmatpush.msra.mxu0 0.0
  %724 = vmatpush.msra.mxu0 0.0
  %725 = vmatpush.msra.mxu0 0.0
  %726 = vmatpush.msra.mxu0 0.0
  %727 = vmatpush.msra.mxu0 0.0
  %728 = vmatpush.msra.mxu0 %v685
  %729 = vmatpush.msra.mxu0 %v684
  %730 = vmatpush.msra.mxu0 %v683
  %731 = vmatpush.msra.mxu0 %v682
  %732 = vmatmul.f32.gmra.mxu0 %v714
  %v733 = vpop.f32.mrf.mxu0
  %v734 = vadd.f32 %v711, %v733
  %735 = vdwg.mxu0
  %v736 = vld [vmem:[%s8] sm:$0x1]
  %v738 = vperm.slane %v736, 0
  %v740 = vadd.f32 %v734, %v738
  %v741 = vmax.f32 %v740, 0.0
  %v742 = vld [vmem:[%s9] sm:$0xff]
  %v743 = vld [vmem:[%s9 + $0x8] sm:$0xff]
  %v744 = vld [vmem:[%s9 + $0x10] sm:$0xff]
  %v745 = vld [vmem:[%s9 + $0x18] sm:$0xff]
  %v746 = vld [vmem:[%s9 + $0x20] sm:$0xff]
  %v747 = vld [vmem:[%s9 + $0x28] sm:$0xff]
  %v748 = vld [vmem:[%s9 + $0x30] sm:$0xff]
  %v749 = vld [vmem:[%s9 + $0x38] sm:$0xff]
  %v750 = vld [vmem:[%s9 + $0x40] sm:$0xff]
  %v751 = vld [vmem:[%s9 + $0x48] sm:$0xff]
  %v752 = vld [vmem:[%s9 + $0x50] sm:$0xff]
  %v753 = vld [vmem:[%s9 + $0x58] sm:$0xff]
  %v754 = vld [vmem:[%s9 + $0x60] sm:$0xff]
  %v755 = vld [vmem:[%s9 + $0x68] sm:$0xff]
  %v756 = vld [vmem:[%s9 + $0x70] sm:$0xff]
  %v757 = vld [vmem:[%s9 + $0x78] sm:$0xff]
  %v758 = vld [vmem:[%s10] sm:$0x1]
  %v760 = vperm.slane %v758, 0
  %762 = vmatpush.msra.mxu0 %v757
  %763 = vmatpush.msra.mxu0 %v756
  %764 = vmatpush.msra.mxu0 %v755
  %765 = vmatpush.msra.mxu0 %v754
  %766 = vmatpush.msra.mxu0 %v753
  %767 = vmatpush.msra.mxu0 %v752
  %768 = vmatpush.msra.mxu0 %v751
  %769 = vmatpush.msra.mxu0 %v750
  %770 = vmatpush.msra.mxu0 %v749
  %771 = vmatpush.msra.mxu0 %v748
  %772 = vmatpush.msra.mxu0 %v747
  %773 = vmatpush.msra.mxu0 %v746
  %774 = vmatpush.msra.mxu0 %v745
  %775 = vmatpush.msra.mxu0 %v744
  %776 = vmatpush.msra.mxu0 %v743
  %777 = vmatpush.msra.mxu0 %v742
  %778 = vmatmul.f32.gmra.mxu0 %v741
  %v779 = vpop.f32.mrf.mxu0
  %v780 = vadd.f32 %v760, %v779
  %781 = vdwg.mxu0
  %v782 = vmax.f32 %v780, 0.0
  %v783 = vld [vmem:[%s11] sm:$0xff]
  %v784 = vld [vmem:[%s11 + $0x8] sm:$0xff]
  %v785 = vld [vmem:[%s11 + $0x10] sm:$0xff]
  %v786 = vld [vmem:[%s11 + $0x18] sm:$0xff]
  %v787 = vld [vmem:[%s11 + $0x20] sm:$0xff]
  %v788 = vld [vmem:[%s11 + $0x28] sm:$0xff]
  %v789 = vld [vmem:[%s11 + $0x30] sm:$0xff]
  %v790 = vld [vmem:[%s11 + $0x38] sm:$0xff]
  %v791 = vld [vmem:[%s12] sm:$0x1]
  %v793 = vperm.slane %v791, 0
  %v796 = vsel %vm634, %v782, 0
  %798 = vmatpush.msra.mxu0 0.0
  %799 = vmatpush.msra.mxu0 0.0
  %800 = vmatpush.msra.mxu0 0.0
  %801 = vmatpush.msra.mxu0 0.0
  %802 = vmatpush.msra.mxu0 0.0
  %803 = vmatpush.msra.mxu0 0.0
  %804 = vmatpush.msra.mxu0 0.0
  %805 = vmatpush.msra.mxu0 0.0
  %806 = vmatpush.msra.mxu0 %v790
  %807 = vmatpush.msra.mxu0 %v789
  %808 = vmatpush.msra.mxu0 %v788
  %809 = vmatpush.msra.mxu0 %v787
  %810 = vmatpush.msra.mxu0 %v786
  %811 = vmatpush.msra.mxu0 %v785
  %812 = vmatpush.msra.mxu0 %v784
  %813 = vmatpush.msra.mxu0 %v783
  %814 = vmatmul.f32.gmra.mxu0 %v796
  %v815 = vpop.f32.mrf.mxu0
  %v816 = vadd.f32 %v793, %v815
  %817 = vdwg.mxu0
  %818 = vst [vmem:[%s13] sm:$0x3] %v816
  // Predicated region
  $region54: #{model001_forward.1} parent=0 // pred_check
    _
  $region55: #{model001_forward.1} parent=0 // pred_check_branch
    %820 = sbr.rel (0) target = $region57
  $region56: #{model001_forward.1} parent=0 // pred_region
    _
  $region57: #{model001_forward.1} parent=0 // pred_fallthru
    _
  // Predicated region
  $region58: #{model001_forward.1} parent=0 // pred_check
    _
  $region59: #{model001_forward.1} parent=0 // pred_check_branch
    %822 = sbr.rel (0) target = $region61
  $region60: #{model001_forward.1} parent=0 // pred_region
    _
  $region61: #{model001_forward.1} parent=0 // pred_fallthru
    _

</llo_original>
